<compile_context>
chip_gen: v6e
topology: v6e:2x2x1
jax: 0.10.0
libtpu: 0.0.40
codegen_flags: <defaults>
</compile_context>

<pallas_src>
import functools

import jax
import jax.numpy as jnp
from jax.experimental import pallas as pl
from jax.experimental.pallas import tpu as pltpu


def cnn_block_kernel(x_ref, w_ref, o_ref, *, kernel_size, stride, l_out,
                     l_out_pad, eps):
    # x_ref: (bn, C_in, L_in_pad)   padded input tile (NCL layout)
    # w_ref: (C_out, K*C_in)        conv weights (resident across grid steps)
    # o_ref: (bn, C_out, L_out_pad) normalized + ReLU'd output tile (NCL layout)
    bn = x_ref.shape[0]

    # Stack the K shifted windows of every sample into one 2D matmul operand:
    #   xcol[k*C_in + c, n*L_out_pad + l] = x[n, c, k + l*stride]
    # Rows are a sublane concat (k-major), columns a 128-aligned lane concat,
    # so no lane-crossing reshapes/transposes are needed.
    rows = []
    for k in range(kernel_size):                      # K is small; static unroll
        cols = []
        for n in range(bn):
            if stride == 1:
                cols.append(x_ref[n, :, k:k + l_out_pad])
            else:
                cols.append(x_ref[n, :, pl.ds(k, l_out_pad, stride)])
        rows.append(cols[0] if bn == 1 else jnp.concatenate(cols, axis=1))
    xcol = rows[0] if kernel_size == 1 else jnp.concatenate(rows, axis=0)

    # Single MXU matmul per grid step: (C_out, K*C_in) @ (K*C_in, bn*L_out_pad),
    # f32 accumulation.  The weight slab is pushed once per step, not per sample.
    acc = jnp.dot(w_ref[...], xcol, preferred_element_type=jnp.float32)

    # InstanceNorm1d(affine=False) + ReLU per sample over the L_out valid lanes
    # (lanes >= l_out are padding).  Two-pass variance (no cancellation, always
    # >= 0); rsqrt goes to the EUP.  Per-sample slices are static, lane-aligned
    # views of `acc`, so no relayouts.
    inv_n = jnp.float32(1.0 / l_out)
    if l_out != l_out_pad:
        lane = jax.lax.broadcasted_iota(jnp.int32, (1, l_out_pad), 1)
        valid = lane < l_out                          # hoisted out of the loop
    for n in range(bn):                               # bn is small; static unroll
        acc_n = acc[:, n * l_out_pad:(n + 1) * l_out_pad]   # (C_out, L_out_pad)
        if l_out != l_out_pad:
            acc_n = jnp.where(valid, acc_n, 0.0)
        mean = jnp.sum(acc_n, axis=1, keepdims=True) * inv_n
        cent = acc_n - mean
        if l_out != l_out_pad:
            cent = jnp.where(valid, cent, 0.0)        # exclude pad lanes from var
        var = jnp.sum(cent * cent, axis=1, keepdims=True) * inv_n
        inv_std = jax.lax.rsqrt(var + eps)
        o_ref[n] = jnp.maximum(cent * inv_std, 0.0).astype(o_ref.dtype)


def _round_up(x, m):
    return ((x + m - 1) // m) * m


def _vmem_capacity_bytes():
    try:
        return int(pltpu.get_tpu_info().vmem_capacity_bytes)
    except Exception:
        return 64 * 1024 * 1024        # conservative: v7x per-core VMEM


@functools.partial(jax.jit,
                   static_argnames=("kernel_size", "stride", "padding",
                                    "batch_block"))
def cnn_block_forward(x, weight, bias=None, *, kernel_size, stride=1,
                      padding=1, batch_block=8):
    """CNNBlock forward: Conv1d -> InstanceNorm1d(affine=False) -> ReLU.

    x: (N, C_in, L); weight: (C_out, C_in, K); bias is accepted for API parity
    but ignored (it cancels exactly under the instance-norm mean subtraction).
    Returns (N, C_out, L_out) in NCL layout, matching the PyTorch module.
    """
    del bias  # cancelled by InstanceNorm(affine=False) mean subtraction
    N, C_in, L = x.shape
    C_out = weight.shape[0]
    KC = kernel_size * C_in
    L_out = (L + 2 * padding - kernel_size) // stride + 1
    L_out_pad = _round_up(L_out, 128)                 # lane-dense output
    L_in_pad = _round_up(max(L + 2 * padding,
                             (L_out_pad - 1) * stride + kernel_size), 128)

    isz = jnp.dtype(x.dtype).itemsize

    def footprint(bn):
        # Per-grid-step bytes: double-buffered input/weight/output blocks plus
        # the in-kernel stacked taps and the f32 matmul result (+ centered copy).
        return (2 * bn * C_in * L_in_pad * isz
                + 2 * C_out * KC * isz
                + 2 * bn * C_out * L_out_pad * isz
                + 2 * KC * bn * L_out_pad * isz
                + 2 * C_out * bn * L_out_pad * 4)

    phys_vmem = _vmem_capacity_bytes()
    budget = int(0.55 * phys_vmem)
    bn = max(1, min(batch_block, N))
    while bn > 1 and footprint(bn) > budget:
        bn -= 1
    # TODO(synk): for very long sequences where even footprint(1) exceeds the
    # budget (notably v7x's 64 MiB VMEM), tile the length axis with an extra
    # 'arbitrary' grid dim, accumulate per-(n, c) sum/sumsq in VMEM scratch,
    # and normalize in a finalize pass.
    grid_n = pl.cdiv(N, bn)
    n_padded = grid_n * bn

    # Host-side work is only cheap zero-padding; no im2col, no transposes.
    x_pad = jnp.pad(x, ((0, n_padded - N), (0, 0),
                        (padding, L_in_pad - L - padding)))
    # (C_out, K*C_in) weight slab ordered to match the in-kernel tap stacking
    # (k-major, then c); kept in the activation dtype.
    w2d = jnp.transpose(weight, (0, 2, 1)).reshape(C_out, KC).astype(x.dtype)

    kernel = functools.partial(cnn_block_kernel, kernel_size=kernel_size,
                               stride=stride, l_out=L_out, l_out_pad=L_out_pad,
                               eps=1e-5)

    vmem_limit = int(min(phys_vmem - (4 << 20),
                         max(48 << 20, footprint(bn) + (16 << 20))))
    flops = (2 * n_padded * C_out * KC * L_out_pad
             + 10 * n_padded * C_out * L_out_pad)
    bytes_accessed = (x_pad.size * isz + w2d.size * isz
                      + n_padded * C_out * L_out_pad * isz)

    out = pl.pallas_call(
        kernel,
        out_shape=jax.ShapeDtypeStruct((n_padded, C_out, L_out_pad), x.dtype),
        grid_spec=pltpu.PrefetchScalarGridSpec(
            num_scalar_prefetch=0,
            grid=(grid_n,),
            in_specs=[
                pl.BlockSpec((bn, C_in, L_in_pad), lambda i: (i, 0, 0)),
                pl.BlockSpec((C_out, KC), lambda i: (0, 0)),  # resident weights
            ],
            out_specs=pl.BlockSpec((bn, C_out, L_out_pad), lambda i: (i, 0, 0)),
        ),
        compiler_params=pltpu.CompilerParams(
            dimension_semantics=("parallel",),
            vmem_limit_bytes=vmem_limit),
        cost_estimate=pl.CostEstimate(
            flops=int(flops),
            transcendentals=int(n_padded * C_out),
            bytes_accessed=int(bytes_accessed)),
    )(x_pad, w2d)

    if n_padded != N or L_out_pad != L_out:
        out = out[:N, :, :L_out]
    return out


def _reference(x, weight, bias, kernel_size, stride, padding):
    # Pure-JAX reference (Conv1d WITH bias -> InstanceNorm1d -> ReLU).
    y = jax.lax.conv_general_dilated(
        x.astype(jnp.float32), weight.astype(jnp.float32),
        window_strides=(stride,), padding=[(padding, padding)],
        dimension_numbers=("NCH", "OIH", "NCH"))
    y = y + bias[None, :, None]
    mean = jnp.mean(y, axis=2, keepdims=True)
    var = jnp.mean((y - mean) ** 2, axis=2, keepdims=True)
    yn = (y - mean) / jnp.sqrt(var + 1e-5)
    return jnp.maximum(yn, 0.0)


if __name__ == "__main__":
    # Small shapes consistent with the module: Conv1d over a sequence.
    N, C_in, L = 2, 4, 16
    C_out, K, stride, padding = 8, 3, 1, 1

    key = jax.random.PRNGKey(0)
    kx, kw, kb = jax.random.split(key, 3)
    x = jax.random.normal(kx, (N, C_in, L), dtype=jnp.float32)
    bound = 1.0 / (C_in * K) ** 0.5
    weight = jax.random.uniform(kw, (C_out, C_in, K), jnp.float32, -bound, bound)
    bias = jax.random.uniform(kb, (C_out,), jnp.float32, -bound, bound)

    out = cnn_block_forward(x, weight, bias,
                            kernel_size=K, stride=stride, padding=padding)
    out = jax.block_until_ready(out)

    ref = _reference(x, weight, bias, K, stride, padding)
    assert out.shape == ref.shape, (out.shape, ref.shape)
    err = float(jnp.max(jnp.abs(out - ref)))
    assert err < 1e-4, err

    print("KERNEL_OK")
</pallas_src>

<mosaic_0001>
module attributes {stable_mosaic.version = 11 : i64} {
  func.func @cnn_block_kernel(%arg0: i32, %arg1: memref<2x4x256xf32, #tpu.memory_space<vmem>>, %arg2: memref<8x12xf32, #tpu.memory_space<vmem>>, %arg3: memref<2x8x128xf32, #tpu.memory_space<vmem>>) attributes {dimension_semantics = [#tpu.dimension_semantics<parallel>], iteration_bounds = array<i64: 1>, scalar_prefetch = 0 : i64, scratch_operands = 0 : i64, tpu.core_type = #tpu.core_type<tc>, window_params = [{transform_indices = @transform_0, window_bounds = array<i64: 2, 4, 256>}, {pipeline_mode = #tpu.pipeline_mode<synchronous>, transform_indices = @transform_1, window_bounds = array<i64: 8, 12>}, {transform_indices = @transform_2, window_bounds = array<i64: 2, 8, 128>}]} {
    %c0 = arith.constant 0 : index
    %c0_0 = arith.constant 0 : index
    %c0_1 = arith.constant 0 : index
    %0 = vector.load %arg1[%c0, %c0_0, %c0_1] : memref<2x4x256xf32, #tpu.memory_space<vmem>>, vector<1x4x128xf32>
    %1 = vector.shape_cast %0 : vector<1x4x128xf32> to vector<4x128xf32>
    %c1 = arith.constant 1 : index
    %c0_2 = arith.constant 0 : index
    %c0_3 = arith.constant 0 : index
    %2 = vector.load %arg1[%c1, %c0_2, %c0_3] : memref<2x4x256xf32, #tpu.memory_space<vmem>>, vector<1x4x128xf32>
    %3 = vector.shape_cast %2 : vector<1x4x128xf32> to vector<4x128xf32>
    %4 = tpu.concatenate %1, %3 in 1 : vector<4x128xf32>, vector<4x128xf32> -> vector<4x256xf32>
    %c0_4 = arith.constant 0 : index
    %c0_5 = arith.constant 0 : index
    %c1_6 = arith.constant 1 : index
    %5 = vector.load %arg1[%c0_4, %c0_5, %c1_6] : memref<2x4x256xf32, #tpu.memory_space<vmem>>, vector<1x4x128xf32>
    %6 = vector.shape_cast %5 : vector<1x4x128xf32> to vector<4x128xf32>
    %c1_7 = arith.constant 1 : index
    %c0_8 = arith.constant 0 : index
    %c1_9 = arith.constant 1 : index
    %7 = vector.load %arg1[%c1_7, %c0_8, %c1_9] : memref<2x4x256xf32, #tpu.memory_space<vmem>>, vector<1x4x128xf32>
    %8 = vector.shape_cast %7 : vector<1x4x128xf32> to vector<4x128xf32>
    %9 = tpu.concatenate %6, %8 in 1 : vector<4x128xf32>, vector<4x128xf32> -> vector<4x256xf32>
    %c0_10 = arith.constant 0 : index
    %c0_11 = arith.constant 0 : index
    %c2 = arith.constant 2 : index
    %10 = vector.load %arg1[%c0_10, %c0_11, %c2] : memref<2x4x256xf32, #tpu.memory_space<vmem>>, vector<1x4x128xf32>
    %11 = vector.shape_cast %10 : vector<1x4x128xf32> to vector<4x128xf32>
    %c1_12 = arith.constant 1 : index
    %c0_13 = arith.constant 0 : index
    %c2_14 = arith.constant 2 : index
    %12 = vector.load %arg1[%c1_12, %c0_13, %c2_14] : memref<2x4x256xf32, #tpu.memory_space<vmem>>, vector<1x4x128xf32>
    %13 = vector.shape_cast %12 : vector<1x4x128xf32> to vector<4x128xf32>
    %14 = tpu.concatenate %11, %13 in 1 : vector<4x128xf32>, vector<4x128xf32> -> vector<4x256xf32>
    %15 = tpu.concatenate %4, %9, %14 in 0 : vector<4x256xf32>, vector<4x256xf32>, vector<4x256xf32> -> vector<12x256xf32>
    %c0_15 = arith.constant 0 : index
    %c0_16 = arith.constant 0 : index
    %16 = vector.load %arg2[%c0_15, %c0_16] : memref<8x12xf32, #tpu.memory_space<vmem>>, vector<8x12xf32>
    %cst = arith.constant dense<0.000000e+00> : vector<8x256xf32>
    %17 = tpu.matmul %16, %15, %cst {dimension_numbers = #tpu.dot_dimension_numbers<[1], [0], [0], [1], [0, 0, 1, 1], [], []>} : vector<8x12xf32>, vector<12x256xf32>, vector<8x256xf32> -> vector<8x256xf32>
    %18 = tpu.iota {dimensions = array<i32: 1>} : vector<1x128xi32>
    %c16_i32 = arith.constant 16 : i32
    %19 = vector.broadcast %c16_i32 : i32 to vector<1x128xi32>
    %20 = arith.cmpi slt, %18, %19 : vector<1x128xi32>
    %21 = vector.extract_strided_slice %17 {offsets = [0, 0], sizes = [8, 128], strides = [1, 1]} : vector<8x256xf32> to vector<8x128xf32>
    %cst_17 = arith.constant 0.000000e+00 : f32
    %22 = vector.shape_cast %20 : vector<1x128xi1> to vector<1x128xi1>
    %23 = vector.broadcast %22 : vector<1x128xi1> to vector<8x128xi1>
    %24 = vector.broadcast %cst_17 : f32 to vector<8x128xf32>
    %25 = arith.select %23, %21, %24 : vector<8x128xi1>, vector<8x128xf32>
    %cst_18 = arith.constant dense<0.000000e+00> : vector<8xf32>
    %26 = vector.multi_reduction <add>, %25, %cst_18 [1] : vector<8x128xf32> to vector<8xf32>
    %27 = vector.shape_cast %26 : vector<8xf32> to vector<8x1xf32>
    %cst_19 = arith.constant 6.250000e-02 : f32
    %28 = vector.broadcast %cst_19 : f32 to vector<8x1xf32>
    %29 = arith.mulf %27, %28 : vector<8x1xf32>
    %30 = vector.broadcast %29 : vector<8x1xf32> to vector<8x128xf32>
    %31 = arith.subf %25, %30 : vector<8x128xf32>
    %cst_20 = arith.constant 0.000000e+00 : f32
    %32 = vector.shape_cast %20 : vector<1x128xi1> to vector<1x128xi1>
    %33 = vector.broadcast %32 : vector<1x128xi1> to vector<8x128xi1>
    %34 = vector.broadcast %cst_20 : f32 to vector<8x128xf32>
    %35 = arith.select %33, %31, %34 : vector<8x128xi1>, vector<8x128xf32>
    %36 = arith.mulf %35, %35 : vector<8x128xf32>
    %cst_21 = arith.constant dense<0.000000e+00> : vector<8xf32>
    %37 = vector.multi_reduction <add>, %36, %cst_21 [1] : vector<8x128xf32> to vector<8xf32>
    %38 = vector.shape_cast %37 : vector<8xf32> to vector<8x1xf32>
    %cst_22 = arith.constant 6.250000e-02 : f32
    %39 = vector.broadcast %cst_22 : f32 to vector<8x1xf32>
    %40 = arith.mulf %38, %39 : vector<8x1xf32>
    %cst_23 = arith.constant 9.99999974E-6 : f32
    %41 = vector.broadcast %cst_23 : f32 to vector<8x1xf32>
    %42 = arith.addf %40, %41 : vector<8x1xf32>
    %43 = math.rsqrt %42 : vector<8x1xf32>
    %44 = vector.broadcast %43 : vector<8x1xf32> to vector<8x128xf32>
    %45 = arith.mulf %35, %44 : vector<8x128xf32>
    %cst_24 = arith.constant 0.000000e+00 : f32
    %46 = vector.broadcast %cst_24 : f32 to vector<8x128xf32>
    %47 = arith.maximumf %45, %46 : vector<8x128xf32>
    %c0_25 = arith.constant 0 : index
    %c0_26 = arith.constant 0 : index
    %c0_27 = arith.constant 0 : index
    %48 = vector.load %arg3[%c0_25, %c0_26, %c0_27] : memref<2x8x128xf32, #tpu.memory_space<vmem>>, vector<1x8x128xf32>
    %49 = vector.shape_cast %48 : vector<1x8x128xf32> to vector<8x128xf32>
    %50 = vector.shape_cast %47 : vector<8x128xf32> to vector<1x8x128xf32>
    tpu.vector_store %arg3[%c0_25, %c0_26, %c0_27], %50 {strides = array<i32>} : memref<2x8x128xf32, #tpu.memory_space<vmem>>, vector<1x8x128xf32>,
    %51 = vector.extract_strided_slice %17 {offsets = [0, 128], sizes = [8, 128], strides = [1, 1]} : vector<8x256xf32> to vector<8x128xf32>
    %cst_28 = arith.constant 0.000000e+00 : f32
    %52 = vector.shape_cast %20 : vector<1x128xi1> to vector<1x128xi1>
    %53 = vector.broadcast %52 : vector<1x128xi1> to vector<8x128xi1>
    %54 = vector.broadcast %cst_28 : f32 to vector<8x128xf32>
    %55 = arith.select %53, %51, %54 : vector<8x128xi1>, vector<8x128xf32>
    %cst_29 = arith.constant dense<0.000000e+00> : vector<8xf32>
    %56 = vector.multi_reduction <add>, %55, %cst_29 [1] : vector<8x128xf32> to vector<8xf32>
    %57 = vector.shape_cast %56 : vector<8xf32> to vector<8x1xf32>
    %cst_30 = arith.constant 6.250000e-02 : f32
    %58 = vector.broadcast %cst_30 : f32 to vector<8x1xf32>
    %59 = arith.mulf %57, %58 : vector<8x1xf32>
    %60 = vector.broadcast %59 : vector<8x1xf32> to vector<8x128xf32>
    %61 = arith.subf %55, %60 : vector<8x128xf32>
    %cst_31 = arith.constant 0.000000e+00 : f32
    %62 = vector.shape_cast %20 : vector<1x128xi1> to vector<1x128xi1>
    %63 = vector.broadcast %62 : vector<1x128xi1> to vector<8x128xi1>
    %64 = vector.broadcast %cst_31 : f32 to vector<8x128xf32>
    %65 = arith.select %63, %61, %64 : vector<8x128xi1>, vector<8x128xf32>
    %66 = arith.mulf %65, %65 : vector<8x128xf32>
    %cst_32 = arith.constant dense<0.000000e+00> : vector<8xf32>
    %67 = vector.multi_reduction <add>, %66, %cst_32 [1] : vector<8x128xf32> to vector<8xf32>
    %68 = vector.shape_cast %67 : vector<8xf32> to vector<8x1xf32>
    %cst_33 = arith.constant 6.250000e-02 : f32
    %69 = vector.broadcast %cst_33 : f32 to vector<8x1xf32>
    %70 = arith.mulf %68, %69 : vector<8x1xf32>
    %cst_34 = arith.constant 9.99999974E-6 : f32
    %71 = vector.broadcast %cst_34 : f32 to vector<8x1xf32>
    %72 = arith.addf %70, %71 : vector<8x1xf32>
    %73 = math.rsqrt %72 : vector<8x1xf32>
    %74 = vector.broadcast %73 : vector<8x1xf32> to vector<8x128xf32>
    %75 = arith.mulf %65, %74 : vector<8x128xf32>
    %cst_35 = arith.constant 0.000000e+00 : f32
    %76 = vector.broadcast %cst_35 : f32 to vector<8x128xf32>
    %77 = arith.maximumf %75, %76 : vector<8x128xf32>
    %c1_36 = arith.constant 1 : index
    %c0_37 = arith.constant 0 : index
    %c0_38 = arith.constant 0 : index
    %78 = vector.load %arg3[%c1_36, %c0_37, %c0_38] : memref<2x8x128xf32, #tpu.memory_space<vmem>>, vector<1x8x128xf32>
    %79 = vector.shape_cast %78 : vector<1x8x128xf32> to vector<8x128xf32>
    %80 = vector.shape_cast %77 : vector<8x128xf32> to vector<1x8x128xf32>
    tpu.vector_store %arg3[%c1_36, %c0_37, %c0_38], %80 {strides = array<i32>} : memref<2x8x128xf32, #tpu.memory_space<vmem>>, vector<1x8x128xf32>,
    return
  }
  func.func @transform_0(%arg0: i32) -> (i32, i32, i32) {
    %c0_i32 = arith.constant 0 : i32
    %c0_i32_0 = arith.constant 0 : i32
    %c0_i32_1 = arith.constant 0 : i32
    return %arg0, %c0_i32, %c0_i32_0 : i32, i32, i32
  }
  func.func @transform_1(%arg0: i32) -> (i32, i32) {
    %c0_i32 = arith.constant 0 : i32
    %c0_i32_0 = arith.constant 0 : i32
    %c0_i32_1 = arith.constant 0 : i32
    return %c0_i32, %c0_i32_0 : i32, i32
  }
  func.func @transform_2(%arg0: i32) -> (i32, i32, i32) {
    %c0_i32 = arith.constant 0 : i32
    %c0_i32_0 = arith.constant 0 : i32
    %c0_i32_1 = arith.constant 0 : i32
    return %arg0, %c0_i32, %c0_i32_0 : i32, i32, i32
  }
}

</mosaic_0001>

<llo_original>
// kernel: cnn_block_forward.1
$region0: #{cnn_block_forward.1}
  #allocation0 [shape = 'u32[]', space=smem, size = 0x4, offset = 0x4, fixed_abs, tag = 'smem constant byte address 0x4 - core index']
  #allocation1 [shape = 'u32[144,128]{1,0:T(1,128)}', space=vmem, size = 0x12000, scoped, tag = 'internal scratch']
  %s0 = inlined_call_operand.vmem [shape: f32[2,4,256], index: 0, kind: input, shape index: {}]
  %s1 = inlined_call_operand.vmem [shape: f32[8,12], index: 1, kind: input, shape index: {}]
  %s2 = inlined_call_operand.hbm [shape: f32[2,8,128], index: 2, kind: output, shape index: {}]
  %s3 = sld [smem:[#allocation0]]
  $region18: #{cnn_block_forward.1} parent=0
    _
  %s5 = ssub.s32 1, %s3
  %s6 = scalar_select 0, %s5, %s3
  $region1: #{cnn_block_forward.1} parent=0
    #allocation2 [shape = 'u8[8192]{0}', space=vmem, size = 0x2000, scoped, tag = 'output window, operand 0, single buffered']
    #allocation3 [shape = 's32[1]{0}', space=sflag, size = 0x4, scoped, tag = 'scoped memory for cnn_block_forward.1']
    %7 = vsyncpa [#allocation3], 0
    // Predicated region
    $region2: #{cnn_block_forward.1} parent=1 // pred_check
      _
    $region3: #{cnn_block_forward.1} parent=1 // pred_check_branch
      %9 = sbr.rel (0) target = $region5
    $region4: #{cnn_block_forward.1} parent=1 // pred_region
      _
    $region5: #{cnn_block_forward.1} parent=1 // pred_fallthru
      _
    // Predicated region
    $region6: #{cnn_block_forward.1} parent=1 // pred_check
      _
    $region7: #{cnn_block_forward.1} parent=1 // pred_check_branch
      %11 = sbr.rel (0) target = $region9
    $region8: #{cnn_block_forward.1} parent=1 // pred_region
      _
    $region9: #{cnn_block_forward.1} parent=1 // pred_fallthru
      _
    %v12 = vld [vmem:[%s0] sm:$0xf]
    %s13 = scalar_lea.vmem %s0, 8
    %v14 = vld [vmem:[%s13] sm:$0xf]
    %v15 = vld [vmem:[%s0] sm:$0xff]
    %v16 = vld [vmem:[%s13] sm:$0xff]
    %v18 = vcombine.high %v15, %v15
    %19 = vrot.lane.b32.xlu0 %v15, 127
    %v20 = vpop.permute.xlu0 %19
    %21 = vrot.lane.b32.xlu0 %v18, 127
    %v22 = vpop.permute.xlu0 %21
    %vm23 = vcmask 1039360
    %v24 = vsel %vm23, %v20, %v22
    %v26 = vcombine.high %v16, %v16
    %27 = vrot.lane.b32.xlu0 %v16, 127
    %v28 = vpop.permute.xlu0 %27
    %29 = vrot.lane.b32.xlu0 %v26, 127
    %v30 = vpop.permute.xlu0 %29
    %v31 = vsel %vm23, %v28, %v30
    %32 = vrot.lane.b32.xlu0 %v15, 126
    %v33 = vpop.permute.xlu0 %32
    %34 = vrot.lane.b32.xlu0 %v18, 126
    %v35 = vpop.permute.xlu0 %34
    %vm36 = vcmask 1031168
    %v37 = vsel %vm36, %v33, %v35
    %38 = vrot.lane.b32.xlu0 %v16, 126
    %v39 = vpop.permute.xlu0 %38
    %40 = vrot.lane.b32.xlu0 %v26, 126
    %v41 = vpop.permute.xlu0 %40
    %v42 = vsel %vm36, %v39, %v41
    %v43 = vrot.slane %v24, 4
    %v44 = vrot.slane %v31, 4
    %vm47 = vcmask 1043456
    %v48 = vsel %vm47, %v12, %v43
    %v49 = vsel %vm47, %v14, %v44
    %v50 = vld [vmem:[%s1] sm:$0xff]
    %vm51 = vcmask 97280
    %v53 = vsel %vm51, %v50, 0
    %v55 = vsel %vm47, %v37, 0
    %v57 = vsel %vm47, %v42, 0
    %59 = vmatprep.subr.mxu0 0.0
    %60 = vmatpush1.msra.mxu0 0.0
    %61 = vmatprep.subr.mxu0 0.0
    %62 = vmatpush1.msra.mxu0 0.0
    %63 = vmatprep.subr.mxu0 0.0
    %64 = vmatpush1.msra.mxu0 0.0
    %65 = vmatprep.subr.mxu0 0.0
    %66 = vmatpush1.msra.mxu0 0.0
    %67 = vmatprep.subr.mxu0 0.0
    %68 = vmatpush1.msra.mxu0 0.0
    %69 = vmatprep.subr.mxu0 0.0
    %70 = vmatpush1.msra.mxu0 0.0
    %71 = vmatprep.subr.mxu0 0.0
    %72 = vmatpush1.msra.mxu0 0.0
    %73 = vmatprep.subr.mxu0 0.0
    %74 = vmatpush1.msra.mxu0 0.0
    %75 = vmatprep.subr.mxu0 0.0
    %76 = vmatpush1.msra.mxu0 0.0
    %77 = vmatprep.subr.mxu0 0.0
    %78 = vmatpush1.msra.mxu0 0.0
    %79 = vmatprep.subr.mxu0 0.0
    %80 = vmatpush1.msra.mxu0 0.0
    %81 = vmatprep.subr.mxu0 0.0
    %82 = vmatpush1.msra.mxu0 0.0
    %83 = vmatprep.subr.mxu0 0.0
    %84 = vmatpush1.msra.mxu0 0.0
    %85 = vmatprep.subr.mxu0 0.0
    %86 = vmatpush1.msra.mxu0 0.0
    %87 = vmatprep.subr.mxu0 %v57
    %88 = vmatpush1.msra.mxu0 %v55
    %89 = vmatprep.subr.mxu0 %v49
    %90 = vmatpush1.msra.mxu0 %v48
    %91 = vmatprep.subr.mxu0 0.0
    %92 = vmatpush2.msra.mxu0 0.0
    %93 = vmatprep.subr.mxu0 0.0
    %94 = vmatpush2.msra.mxu0 0.0
    %95 = vmatprep.subr.mxu0 0.0
    %96 = vmatpush2.msra.mxu0 0.0
    %97 = vmatprep.subr.mxu0 0.0
    %98 = vmatpush2.msra.mxu0 0.0
    %99 = vmatprep.subr.mxu0 0.0
    %100 = vmatpush2.msra.mxu0 0.0
    %101 = vmatprep.subr.mxu0 0.0
    %102 = vmatpush2.msra.mxu0 0.0
    %103 = vmatprep.subr.mxu0 0.0
    %104 = vmatpush2.msra.mxu0 0.0
    %105 = vmatprep.subr.mxu0 0.0
    %106 = vmatpush2.msra.mxu0 0.0
    %107 = vmatprep.subr.mxu0 0.0
    %108 = vmatpush2.msra.mxu0 0.0
    %109 = vmatprep.subr.mxu0 0.0
    %110 = vmatpush2.msra.mxu0 0.0
    %111 = vmatprep.subr.mxu0 0.0
    %112 = vmatpush2.msra.mxu0 0.0
    %113 = vmatprep.subr.mxu0 0.0
    %114 = vmatpush2.msra.mxu0 0.0
    %115 = vmatprep.subr.mxu0 0.0
    %116 = vmatpush2.msra.mxu0 0.0
    %117 = vmatprep.subr.mxu0 0.0
    %118 = vmatpush2.msra.mxu0 0.0
    %119 = vmatprep.subr.mxu0 0.0
    %120 = vmatpush2.msra.mxu0 0.0
    %121 = vmatprep.subr.mxu0 0.0
    %122 = vmatpush2.msra.mxu0 0.0
    %123 = vmatprep.mubr.f32.mxu0 0.0
    %124 = vmatmul.mubr.f32.gmra.mxu0 %v53
    %v125 = vpop.f32.mrf.mxu0
    %v126 = vadd.f32 0.0, %v125
    %v127 = vpop.f32.mrf.mxu0
    %v128 = vadd.f32 0.0, %v127
    %129 = vdwg.mxu0
    %v130 = vlaneseq
    %v131 = vand.u32 %v130, 127
    %vm132 = vcmp.lt.s32.totalorder %v131, 16
    %v133 = vsel %vm132, 1, 0
    %vm134 = vcmp.eq.s32.totalorder %v133, 1
    %v135 = vsel %vm134, %v126, 0.0
    %136 = vadd.xlane.f32.xlu0 %v135
    %v137 = vpop.xlane.xlu0 %136
    %v138 = vmul.f32 %v137, 0.0625
    %v139 = vsub.f32 %v135, %v138
    %v140 = vsel %vm134, %v139, 0.0
    %v141 = vmul.f32 %v140, %v140
    %142 = vadd.xlane.f32.xlu0 %v141
    %v143 = vpop.xlane.xlu0 %142
    %v144 = vmul.f32 %v143, 0.0625
    %v145 = vadd.f32 %v144, 1e-05
    %v146 = vrsqrt.pop %v145
    %v147 = vmul.f32 %v140, %v146
    %v148 = vmax.f32 %v147, 0.0
    %149 = vst [vmem:[#allocation2] sm:$0xff] %v148
    %v150 = vsel %vm134, %v128, 0.0
    %151 = vadd.xlane.f32.xlu0 %v150
    %v152 = vpop.xlane.xlu0 %151
    %v153 = vmul.f32 %v152, 0.0625
    %v154 = vsub.f32 %v150, %v153
    %v155 = vsel %vm134, %v154, 0.0
    %v156 = vmul.f32 %v155, %v155
    %157 = vadd.xlane.f32.xlu0 %v156
    %v158 = vpop.xlane.xlu0 %157
    %v159 = vmul.f32 %v158, 0.0625
    %v160 = vadd.f32 %v159, 1e-05
    %v161 = vrsqrt.pop %v160
    %v162 = vmul.f32 %v155, %v161
    %v163 = vmax.f32 %v162, 0.0
    %s164 = scalar_lea.vmem [#allocation2], 8
    %165 = vst [vmem:[%s164] sm:$0xff] %v163
    // Predicated region
    $region10: #{cnn_block_forward.1} parent=1 // pred_check
      _
    $region11: #{cnn_block_forward.1} parent=1 // pred_check_branch
      %167 = sbr.rel (0) target = $region13
    $region12: #{cnn_block_forward.1} parent=1 // pred_region
      %s169 = ssub.s32 256, 256
      %170 = vsyncadd [#allocation3], %s169
      %s171 = sshll.u32 [#allocation2], 4
      %s172 = int_to_ptr.vmem [resolvable:$true] %s171
      %177 = dma.vmem_to_hbm [thread:$0]  %s172, 256, %s2, [#allocation3], 128, 128, 8
    $region13: #{cnn_block_forward.1} parent=1 // pred_fallthru
      _
    // Predicated region
    $region14: #{cnn_block_forward.1} parent=1 // pred_check
      _
    $region15: #{cnn_block_forward.1} parent=1 // pred_check_branch
      %179 = sbr.rel (0) target = $region17
    $region16: #{cnn_block_forward.1} parent=1 // pred_region
      %180 = dma.done [#allocation3], 256
    $region17: #{cnn_block_forward.1} parent=1 // pred_fallthru
      _
    %181 = vsyncpa [#allocation3], 1

</llo_original>
